<compile_context>
chip_gen: v6e
topology: v6e:2x2x1
jax: 0.10.0
libtpu: 0.0.40
codegen_flags: <defaults>
</compile_context>

<pallas_src>
import jax
import jax.numpy as jnp
from jax.experimental import pallas as pl
from jax.experimental.pallas import tpu as pltpu


def discriminator_kernel(a_ref, x_ref, wd_ref, bd_ref, wf_ref, bf_ref, out_ref):
    """One block of Bblk graphs per grid step.

    a_ref : [Bblk, Np, Np]  pre-normalized adjacency D^-1/2 (A+I) D^-1/2 (bf16, zero-padded)
    x_ref : [Bblk, Np, F]   node features (bf16, zero-padded rows)
    wd_ref: [F, 2]          GCNConv weight (f32, stored [in, out])
    bd_ref: [1, 2]          GCNConv bias (f32)
    wf_ref: [Np, 2]         fc weight, [1, 2N] reshaped row-major to [N, 2], padded rows = 0
    bf_ref: [1]             fc bias scalar (f32, SMEM)
    out_ref: [1, 1, Bblk]   sigmoid(logit) per graph
    """
    bblk, np_, fin = x_ref.shape

    x = x_ref[...].astype(jnp.float32)          # [Bblk, Np, F]
    a = a_ref[...].astype(jnp.float32)          # [Bblk, Np, Np]

    # GCNConv: hoisted feature projection (one tall matmul for the whole block),
    # then per-graph aggregation with the pre-normalized adjacency.
    xw = jnp.dot(x.reshape(bblk * np_, fin), wd_ref[...],
                 preferred_element_type=jnp.float32).reshape(bblk, np_, 2)
    agg = jnp.einsum('bij,bjc->bic', a, xw,
                     preferred_element_type=jnp.float32)        # [Bblk, Np, 2]

    # ReLU; gaussian noise & dropout are no-ops (training=False).
    d = jnp.maximum(agg + bd_ref[...], 0.0)                     # [Bblk, Np, 2]

    # flatten([N,2]) @ Linear(2N,1).weight.T + bias == sum(d * wf) + bf per graph.
    # Padded node rows of wf are zero, so padded nodes contribute nothing.
    logits = jnp.sum(d * wf_ref[...], axis=(1, 2)) + bf_ref[0]  # [Bblk]
    out_ref[...] = jax.nn.sigmoid(logits).reshape(1, 1, bblk)


def discriminator_forward(features, edge_index, edge_attr, params,
                          *, input_dtype=jnp.bfloat16):
    """features: [B, N, F] float, edge_index: [B, 2, E] int, edge_attr: [B, E] float.

    Returns [B] per-graph probabilities (matches torch.sigmoid(x).squeeze()).
    """
    f32 = jnp.float32
    B, N, Fin = features.shape
    Np = ((N + 7) // 8) * 8            # pad nodes to a sublane multiple (28 -> 32)

    # --- batch blocking: >=2 grid steps (v7x megacore), <=128 graphs/step ---
    Bblk = min(128, pl.cdiv(B, 2)) if B >= 2 else 1
    num_blocks = pl.cdiv(B, Bblk)
    B_pad = num_blocks * Bblk

    # --- glue: normalized dense adjacency, scatter-free (one-hot matmul) ---
    def build_a_norm(ei, ea):
        src_oh = jax.nn.one_hot(ei[0], N, dtype=f32)            # [E, N]
        dst_oh = jax.nn.one_hot(ei[1], N, dtype=f32)            # [E, N]
        A = jnp.dot(dst_oh.T, src_oh * ea.astype(f32)[:, None]) # A[dst, src] += w
        A_hat = A + jnp.eye(N, dtype=f32)                       # self loops (fill=1)
        deg = jnp.sum(A_hat, axis=1)                            # in-degree incl. self loop
        dinv = jnp.where(deg > 0, jax.lax.rsqrt(deg), 0.0)      # PyG's inf -> 0 guard
        A_norm = (dinv[:, None] * A_hat) * dinv[None, :]
        return jnp.pad(A_norm, ((0, Np - N), (0, Np - N)))

    A_norm = jax.vmap(build_a_norm)(edge_index, edge_attr).astype(input_dtype)
    X = jnp.pad(features.astype(f32),
                ((0, 0), (0, Np - N), (0, 0))).astype(input_dtype)
    if B_pad != B:
        A_norm = jnp.pad(A_norm, ((0, B_pad - B), (0, 0), (0, 0)))
        X = jnp.pad(X, ((0, B_pad - B), (0, 0), (0, 0)))

    # --- parameters: small resident VMEM inputs + SMEM scalar ---
    wd = params["wd"].astype(f32)                                     # [F, 2]
    bd = params["bd"].astype(f32).reshape(1, 2)                       # [1, 2]
    wf = jnp.pad(params["wf"].astype(f32), ((0, Np - N), (0, 0)))     # [Np, 2]
    bf = jnp.asarray(params["bf"], f32).reshape(1)                    # [1] (SMEM)

    flops = B_pad * (2 * Np * Fin * 2 + 2 * Np * Np * 2 + 6 * Np * 2)
    bytes_accessed = int((A_norm.size + X.size) * A_norm.dtype.itemsize
                         + 4 * (wd.size + bd.size + wf.size + 1 + B_pad))

    out = pl.pallas_call(
        discriminator_kernel,
        out_shape=jax.ShapeDtypeStruct((num_blocks, 1, Bblk), f32),
        grid=(num_blocks,),
        in_specs=[
            pl.BlockSpec((Bblk, Np, Np), lambda b: (b, 0, 0)),   # adjacency block
            pl.BlockSpec((Bblk, Np, Fin), lambda b: (b, 0, 0)),  # feature block
            pl.BlockSpec((Fin, 2), lambda b: (0, 0)),            # GCN weight (resident)
            pl.BlockSpec((1, 2), lambda b: (0, 0)),              # GCN bias (resident)
            pl.BlockSpec((Np, 2), lambda b: (0, 0)),             # fc weight (resident)
            pl.BlockSpec(memory_space=pltpu.MemorySpace.SMEM),   # fc bias scalar
        ],
        out_specs=pl.BlockSpec((1, 1, Bblk), lambda b: (b, 0, 0)),
        compiler_params=pltpu.CompilerParams(
            dimension_semantics=("parallel",)),
        cost_estimate=pl.CostEstimate(
            flops=flops, transcendentals=B_pad, bytes_accessed=bytes_accessed),
    )(A_norm, X, wd, bd, wf, bf)

    return out.reshape(B_pad)[:B]


def init_params(key, n_nodes, n_features):
    """Deterministic synthetic parameters matching the module's shapes."""
    f32 = jnp.float32
    ks = jax.random.split(key, 3)
    return {
        # GCNConv(F, 2) weight, stored pre-transposed as [in, out]
        "wd": (0.2 * jax.random.normal(ks[0], (n_features, 2))).astype(f32),
        "bd": jnp.zeros((2,), f32),
        # Linear(2N, 1) weight [1, 2N] reshaped row-major to [N, 2] so it aligns
        # with torch.flatten of the [N, 2] conv output.
        "wf": (0.2 * jax.random.normal(ks[1], (n_nodes, 2))).astype(f32),
        "bf": (0.2 * jax.random.normal(ks[2], ())).astype(f32),
    }


if __name__ == "__main__":
    # Small, module-consistent shapes: batch=2 graphs, n_nodes=28 (module default),
    # n_features=4.
    B, N, Fin = 2, 28, 4
    key = jax.random.PRNGKey(0)
    k_feat, k_edge, k_param = jax.random.split(key, 3)

    # Undirected ring graph on N nodes (both directions), same topology per graph,
    # different edge weights per graph.
    src = jnp.arange(N, dtype=jnp.int32)
    dst = (src + 1) % N
    ei = jnp.stack([jnp.concatenate([src, dst]),
                    jnp.concatenate([dst, src])], axis=0)              # [2, 2N]
    edge_index = jnp.broadcast_to(ei, (B, 2, 2 * N))                   # [B, 2, 2N]
    edge_attr = jax.random.uniform(k_edge, (B, 2 * N), minval=0.5, maxval=1.5)

    features = jax.random.normal(k_feat, (B, N, Fin), dtype=jnp.float32)
    params = init_params(k_param, n_nodes=N, n_features=Fin)

    out = discriminator_forward(features, edge_index, edge_attr, params)
    jax.block_until_ready(out)
    assert out.shape == (B,)
    assert bool(jnp.all(jnp.isfinite(out)))
    assert bool(jnp.all((out > 0.0) & (out < 1.0)))
    print("KERNEL_OK")
</pallas_src>

<mosaic_0001>
module attributes {stable_mosaic.version = 11 : i64} {
  func.func @discriminator_kernel(%arg0: i32, %arg1: memref<1x32x32xbf16, #tpu.memory_space<vmem>>, %arg2: memref<1x32x4xbf16, #tpu.memory_space<vmem>>, %arg3: memref<4x2xf32, #tpu.memory_space<vmem>>, %arg4: memref<1x2xf32, #tpu.memory_space<vmem>>, %arg5: memref<32x2xf32, #tpu.memory_space<vmem>>, %arg6: memref<1xf32, #tpu.memory_space<smem>>, %arg7: memref<1x1x1xf32, #tpu.memory_space<vmem>>) attributes {dimension_semantics = [#tpu.dimension_semantics<parallel>], iteration_bounds = array<i64: 2>, scalar_prefetch = 0 : i64, scratch_operands = 0 : i64, tpu.core_type = #tpu.core_type<tc>, window_params = [{transform_indices = @transform_0, window_bounds = array<i64: 1, 32, 32>}, {transform_indices = @transform_1, window_bounds = array<i64: 1, 32, 4>}, {pipeline_mode = #tpu.pipeline_mode<synchronous>, transform_indices = @transform_2, window_bounds = array<i64: 4, 2>}, {pipeline_mode = #tpu.pipeline_mode<synchronous>, transform_indices = @transform_3, window_bounds = array<i64: 1, 2>}, {pipeline_mode = #tpu.pipeline_mode<synchronous>, transform_indices = @transform_4, window_bounds = array<i64: 32, 2>}, {transform_indices = @transform_5, window_bounds = array<i64: 1>}, {transform_indices = @transform_6, window_bounds = array<i64: 1, 1, 1>}]} {
    %c0 = arith.constant 0 : index
    %c0_0 = arith.constant 0 : index
    %c0_1 = arith.constant 0 : index
    %0 = vector.load %arg2[%c0, %c0_0, %c0_1] : memref<1x32x4xbf16, #tpu.memory_space<vmem>>, vector<1x32x4xbf16>
    %1 = arith.extf %0 : vector<1x32x4xbf16> to vector<1x32x4xf32>
    %c0_2 = arith.constant 0 : index
    %c0_3 = arith.constant 0 : index
    %c0_4 = arith.constant 0 : index
    %2 = vector.load %arg1[%c0_2, %c0_3, %c0_4] : memref<1x32x32xbf16, #tpu.memory_space<vmem>>, vector<1x32x32xbf16>
    %3 = arith.extf %2 : vector<1x32x32xbf16> to vector<1x32x32xf32>
    %4 = vector.shape_cast %1 : vector<1x32x4xf32> to vector<32x4xf32>
    %c0_5 = arith.constant 0 : index
    %c0_6 = arith.constant 0 : index
    %5 = vector.load %arg3[%c0_5, %c0_6] : memref<4x2xf32, #tpu.memory_space<vmem>>, vector<4x2xf32>
    %cst = arith.constant dense<0.000000e+00> : vector<32x2xf32>
    %6 = tpu.matmul %4, %5, %cst {dimension_numbers = #tpu.dot_dimension_numbers<[1], [0], [0], [1], [0, 0, 1, 1], [], []>} : vector<32x4xf32>, vector<4x2xf32>, vector<32x2xf32> -> vector<32x2xf32>
    %7 = vector.shape_cast %6 : vector<32x2xf32> to vector<1x32x2xf32>
    "tpu.trace_start"() <{level = 10 : i32, message = "bij,bjc->bic"}> : () -> ()
    %cst_7 = arith.constant dense<0.000000e+00> : vector<1x32x2xf32>
    %8 = tpu.matmul %3, %7, %cst_7 {dimension_numbers = #tpu.dot_dimension_numbers<[2], [1], [1], [2], [0, 0, 0, 1, 1, 2], [0], [0]>} : vector<1x32x32xf32>, vector<1x32x2xf32>, vector<1x32x2xf32> -> vector<1x32x2xf32>
    "tpu.trace_stop"() : () -> ()
    %c0_8 = arith.constant 0 : index
    %c0_9 = arith.constant 0 : index
    %9 = vector.load %arg4[%c0_8, %c0_9] : memref<1x2xf32, #tpu.memory_space<vmem>>, vector<1x2xf32>
    %10 = vector.shape_cast %9 : vector<1x2xf32> to vector<1x1x2xf32>
    %11 = vector.broadcast %10 : vector<1x1x2xf32> to vector<1x32x2xf32>
    %12 = arith.addf %8, %11 : vector<1x32x2xf32>
    %cst_10 = arith.constant 0.000000e+00 : f32
    %13 = vector.broadcast %cst_10 : f32 to vector<1x32x2xf32>
    %14 = arith.maximumf %12, %13 : vector<1x32x2xf32>
    %c0_11 = arith.constant 0 : index
    %c0_12 = arith.constant 0 : index
    %15 = vector.load %arg5[%c0_11, %c0_12] : memref<32x2xf32, #tpu.memory_space<vmem>>, vector<32x2xf32>
    %16 = vector.shape_cast %15 : vector<32x2xf32> to vector<1x32x2xf32>
    %17 = arith.mulf %14, %16 : vector<1x32x2xf32>
    %cst_13 = arith.constant dense<0.000000e+00> : vector<1xf32>
    %18 = vector.multi_reduction <add>, %17, %cst_13 [1, 2] : vector<1x32x2xf32> to vector<1xf32>
    %c0_14 = arith.constant 0 : index
    %19 = memref.load %arg6[%c0_14] : memref<1xf32, #tpu.memory_space<smem>>
    %20 = vector.broadcast %19 : f32 to vector<1xf32>
    %21 = arith.addf %18, %20 : vector<1xf32>
    %22 = arith.negf %21 : vector<1xf32>
    %23 = math.exp %22 : vector<1xf32>
    %cst_15 = arith.constant 1.000000e+00 : f32
    %24 = vector.broadcast %cst_15 : f32 to vector<1xf32>
    %25 = arith.addf %24, %23 : vector<1xf32>
    %26 = arith.divf %24, %25 : vector<1xf32>
    %27 = vector.shape_cast %26 : vector<1xf32> to vector<1x1x1xf32>
    %c0_16 = arith.constant 0 : index
    %c0_17 = arith.constant 0 : index
    %c0_18 = arith.constant 0 : index
    %28 = vector.load %arg7[%c0_16, %c0_17, %c0_18] : memref<1x1x1xf32, #tpu.memory_space<vmem>>, vector<1x1x1xf32>
    tpu.vector_store %arg7[%c0_16, %c0_17, %c0_18], %27 {strides = array<i32>} : memref<1x1x1xf32, #tpu.memory_space<vmem>>, vector<1x1x1xf32>,
    return
  }
  func.func @transform_0(%arg0: i32) -> (i32, i32, i32) {
    %c0_i32 = arith.constant 0 : i32
    %c0_i32_0 = arith.constant 0 : i32
    %c0_i32_1 = arith.constant 0 : i32
    return %arg0, %c0_i32, %c0_i32_0 : i32, i32, i32
  }
  func.func @transform_1(%arg0: i32) -> (i32, i32, i32) {
    %c0_i32 = arith.constant 0 : i32
    %c0_i32_0 = arith.constant 0 : i32
    %c0_i32_1 = arith.constant 0 : i32
    return %arg0, %c0_i32, %c0_i32_0 : i32, i32, i32
  }
  func.func @transform_2(%arg0: i32) -> (i32, i32) {
    %c0_i32 = arith.constant 0 : i32
    %c0_i32_0 = arith.constant 0 : i32
    %c0_i32_1 = arith.constant 0 : i32
    return %c0_i32, %c0_i32_0 : i32, i32
  }
  func.func @transform_3(%arg0: i32) -> (i32, i32) {
    %c0_i32 = arith.constant 0 : i32
    %c0_i32_0 = arith.constant 0 : i32
    %c0_i32_1 = arith.constant 0 : i32
    return %c0_i32, %c0_i32_0 : i32, i32
  }
  func.func @transform_4(%arg0: i32) -> (i32, i32) {
    %c0_i32 = arith.constant 0 : i32
    %c0_i32_0 = arith.constant 0 : i32
    %c0_i32_1 = arith.constant 0 : i32
    return %c0_i32, %c0_i32_0 : i32, i32
  }
  func.func @transform_5(%arg0: i32) -> i32 {
    %c0_i32 = arith.constant 0 : i32
    %c0_i32_0 = arith.constant 0 : i32
    return %c0_i32 : i32
  }
  func.func @transform_6(%arg0: i32) -> (i32, i32, i32) {
    %c0_i32 = arith.constant 0 : i32
    %c0_i32_0 = arith.constant 0 : i32
    %c0_i32_1 = arith.constant 0 : i32
    return %arg0, %c0_i32, %c0_i32_0 : i32, i32, i32
  }
}

</mosaic_0001>

<llo_original>
// kernel: tpu_custom_call.1
$region0: #{tpu_custom_call.1}
  #allocation0 [shape = 'u32[]', space=smem, size = 0x4, offset = 0x4, fixed_abs, tag = 'smem constant byte address 0x4 - core index']
  #allocation1 [shape = 'u32[144,128]{1,0:T(1,128)}', space=vmem, size = 0x12000, scoped, tag = 'internal scratch']
  #allocation2 [shape = 'f32[1]{0:T(128)S(6)}', space=smem, size = 0x200, scoped, tag = 'scoped memory for tpu_custom_call.1']
  %s0 = inlined_call_operand.vmem [shape: bf16[2,32,32], index: 0, kind: input, shape index: {}]
  %s1 = inlined_call_operand.vmem [shape: bf16[2,32,4], index: 1, kind: input, shape index: {}]
  %s2 = inlined_call_operand.vmem [shape: f32[4,2], index: 2, kind: input, shape index: {}]
  %s3 = inlined_call_operand.vmem [shape: f32[1,2], index: 3, kind: input, shape index: {}]
  %s4 = inlined_call_operand.vmem [shape: f32[32,2], index: 4, kind: input, shape index: {}]
  %s5 = inlined_call_operand.<no memory space> [shape: f32[1], index: 5, kind: input, shape index: {}]
  %s6 = inlined_call_operand.vmem [shape: f32[2,1,1], index: 6, kind: output, shape index: {}]
  %s7 = sld [smem:[#allocation0]]
  $region57: #{tpu_custom_call.1} parent=0
    _
  %s9 = ssub.s32 1, %s7
  %s10 = scalar_select 0, %s9, %s7
  %11 = sst [smem:[#allocation2]] %s5
  loop: start=0, step=1, limit=4
  $region2: #{tpu_custom_call.1} parent=0 // loop_pre_header
    _
  $region3: #{tpu_custom_call.1} parent=0 // loop_header
    %s13 = sphi 0, %s17
    %p14 = scmp.ge.s32.totalorder %s13, 4
    %s23 = sphi 0, %s25
    %s26 = sphi 0, %s23
    %s27 = sphi 0, %s26
    %s43 = sphi 0, %s27
    %s49 = sphi 0, %s51
    %s52 = sphi 0, %s49
    %s53 = sphi 0, %s52
    %s69 = sphi 0, %s53
    %s73 = sphi 0, %s73
    %s75 = sphi 0, %s73
    %s76 = sphi 0, %s75
    %s90 = sphi 0, %s76
    %s94 = sphi 0, %s94
    %s96 = sphi 0, %s94
    %s97 = sphi 0, %s96
    %s111 = sphi 0, %s97
    %s115 = sphi 0, %s115
    %s117 = sphi 0, %s115
    %s118 = sphi 0, %s117
    %s132 = sphi 0, %s118
    %s136 = sphi 0, %s136
    %s138 = sphi 0, %s136
    %s139 = sphi 0, %s138
    %s153 = sphi 0, %s139
    %s159 = sphi 0, %s161
    %s162 = sphi 0, %s159
    %s163 = sphi 0, %s162
    %s179 = sphi 0, %s163
  $region4: #{tpu_custom_call.1} parent=0 // loop_header_branch
    %16 = sbr.rel (%p14) target = $region8
  $region5: #{tpu_custom_call.1} parent=0 // loop_body
    %s18 = ssub.s32 %s13, 1
    %s19 = ssub.s32 %s13, 2
    %s20 = sadd.s32 %s13, 1
    %s21 = ssub.s32 %s13, %s20
    %p22 = scmp.eq.s32.totalorder %s21, 0
    %s24 = sadd.s32 %s23, 1
    %s25 = scalar_select %p22, %s23, %s24
    %p28 = pneg %p22
    %p29 = scmp.eq.s32.totalorder %s13, 1
    %p30 = por %p28, %p29
    %p31 = scmp.ne.s32.totalorder %s23, %s26
    %p32 = scmp.eq.s32.totalorder %s13, 0
    %p33 = por %p31, %p32
    %p34 = scmp.ne.s32.totalorder %s23, %s26
    %p35 = scmp.eq.s32.totalorder %s18, 1
    %p36 = por %p34, %p35
    %p37 = scmp.ne.s32.totalorder %s26, %s27
    %p38 = scmp.eq.s32.totalorder %s18, 0
    %p39 = por %p37, %p38
    %p40 = scmp.ne.s32.totalorder %s26, %s27
    %p41 = scmp.eq.s32.totalorder %s19, 1
    %p42 = por %p40, %p41
    %p44 = scmp.ne.s32.totalorder %s27, %s43
    %p45 = scmp.eq.s32.totalorder %s19, 0
    %p46 = por %p44, %p45
    %s47 = ssub.s32 %s13, %s20
    %p48 = scmp.eq.s32.totalorder %s47, 0
    %s50 = sadd.s32 %s49, 1
    %s51 = scalar_select %p48, %s49, %s50
    %p54 = pneg %p48
    %p55 = scmp.eq.s32.totalorder %s13, 1
    %p56 = por %p54, %p55
    %p57 = scmp.ne.s32.totalorder %s49, %s52
    %p58 = scmp.eq.s32.totalorder %s13, 0
    %p59 = por %p57, %p58
    %p60 = scmp.ne.s32.totalorder %s49, %s52
    %p61 = scmp.eq.s32.totalorder %s18, 1
    %p62 = por %p60, %p61
    %p63 = scmp.ne.s32.totalorder %s52, %s53
    %p64 = scmp.eq.s32.totalorder %s18, 0
    %p65 = por %p63, %p64
    %p66 = scmp.ne.s32.totalorder %s52, %s53
    %p67 = scmp.eq.s32.totalorder %s19, 1
    %p68 = por %p66, %p67
    %p70 = scmp.ne.s32.totalorder %s53, %s69
    %p71 = scmp.eq.s32.totalorder %s19, 0
    %p72 = por %p70, %p71
    %s74 = sadd.s32 %s73, 1
    %p77 = scmp.eq.s32.totalorder %s13, 1
    %p78 = scmp.ne.s32.totalorder %s73, %s75
    %p79 = scmp.eq.s32.totalorder %s13, 0
    %p80 = por %p78, %p79
    %p81 = scmp.ne.s32.totalorder %s73, %s75
    %p82 = scmp.eq.s32.totalorder %s18, 1
    %p83 = por %p81, %p82
    %p84 = scmp.ne.s32.totalorder %s75, %s76
    %p85 = scmp.eq.s32.totalorder %s18, 0
    %p86 = por %p84, %p85
    %p87 = scmp.ne.s32.totalorder %s75, %s76
    %p88 = scmp.eq.s32.totalorder %s19, 1
    %p89 = por %p87, %p88
    %p91 = scmp.ne.s32.totalorder %s76, %s90
    %p92 = scmp.eq.s32.totalorder %s19, 0
    %p93 = por %p91, %p92
    %s95 = sadd.s32 %s94, 1
    %p98 = scmp.eq.s32.totalorder %s13, 1
    %p99 = scmp.ne.s32.totalorder %s94, %s96
    %p100 = scmp.eq.s32.totalorder %s13, 0
    %p101 = por %p99, %p100
    %p102 = scmp.ne.s32.totalorder %s94, %s96
    %p103 = scmp.eq.s32.totalorder %s18, 1
    %p104 = por %p102, %p103
    %p105 = scmp.ne.s32.totalorder %s96, %s97
    %p106 = scmp.eq.s32.totalorder %s18, 0
    %p107 = por %p105, %p106
    %p108 = scmp.ne.s32.totalorder %s96, %s97
    %p109 = scmp.eq.s32.totalorder %s19, 1
    %p110 = por %p108, %p109
    %p112 = scmp.ne.s32.totalorder %s97, %s111
    %p113 = scmp.eq.s32.totalorder %s19, 0
    %p114 = por %p112, %p113
    %s116 = sadd.s32 %s115, 1
    %p119 = scmp.eq.s32.totalorder %s13, 1
    %p120 = scmp.ne.s32.totalorder %s115, %s117
    %p121 = scmp.eq.s32.totalorder %s13, 0
    %p122 = por %p120, %p121
    %p123 = scmp.ne.s32.totalorder %s115, %s117
    %p124 = scmp.eq.s32.totalorder %s18, 1
    %p125 = por %p123, %p124
    %p126 = scmp.ne.s32.totalorder %s117, %s118
    %p127 = scmp.eq.s32.totalorder %s18, 0
    %p128 = por %p126, %p127
    %p129 = scmp.ne.s32.totalorder %s117, %s118
    %p130 = scmp.eq.s32.totalorder %s19, 1
    %p131 = por %p129, %p130
    %p133 = scmp.ne.s32.totalorder %s118, %s132
    %p134 = scmp.eq.s32.totalorder %s19, 0
    %p135 = por %p133, %p134
    %s137 = sadd.s32 %s136, 1
    %p140 = scmp.eq.s32.totalorder %s13, 1
    %p141 = scmp.ne.s32.totalorder %s136, %s138
    %p142 = scmp.eq.s32.totalorder %s13, 0
    %p143 = por %p141, %p142
    %p144 = scmp.ne.s32.totalorder %s136, %s138
    %p145 = scmp.eq.s32.totalorder %s18, 1
    %p146 = por %p144, %p145
    %p147 = scmp.ne.s32.totalorder %s138, %s139
    %p148 = scmp.eq.s32.totalorder %s18, 0
    %p149 = por %p147, %p148
    %p150 = scmp.ne.s32.totalorder %s138, %s139
    %p151 = scmp.eq.s32.totalorder %s19, 1
    %p152 = por %p150, %p151
    %p154 = scmp.ne.s32.totalorder %s139, %s153
    %p155 = scmp.eq.s32.totalorder %s19, 0
    %p156 = por %p154, %p155
    %s157 = ssub.s32 %s13, %s20
    %p158 = scmp.eq.s32.totalorder %s157, 0
    %s160 = sadd.s32 %s159, 1
    %s161 = scalar_select %p158, %s159, %s160
    %p164 = pneg %p158
    %p165 = scmp.eq.s32.totalorder %s13, 1
    %p166 = por %p164, %p165
    %p167 = scmp.ne.s32.totalorder %s159, %s162
    %p168 = scmp.eq.s32.totalorder %s13, 0
    %p169 = por %p167, %p168
    %p170 = scmp.ne.s32.totalorder %s159, %s162
    %p171 = scmp.eq.s32.totalorder %s18, 1
    %p172 = por %p170, %p171
    %p173 = scmp.ne.s32.totalorder %s162, %s163
    %p174 = scmp.eq.s32.totalorder %s18, 0
    %p175 = por %p173, %p174
    %p176 = scmp.ne.s32.totalorder %s162, %s163
    %p177 = scmp.eq.s32.totalorder %s19, 1
    %p178 = por %p176, %p177
    %p180 = scmp.ne.s32.totalorder %s163, %s179
    %p181 = scmp.eq.s32.totalorder %s19, 0
    %p182 = por %p180, %p181
    %p183 = scmp.le.s32.totalorder 1, %s13
    %p184 = scmp.lt.s32.totalorder %s13, 3
    %p185 = pnand %p183, %p184
    %p186 = pneg %p185
    // Predicated region
    $region9: #{tpu_custom_call.1} parent=5 // pred_check
      _
    $region10: #{tpu_custom_call.1} parent=5 // pred_check_branch
      %188 = sbr.rel (%p185) target = $region12
    $region11: #{tpu_custom_call.1} parent=5 // pred_region
      %s189 = ssub.s32 %s13, 1
      // Predicated region
      $region13: #{tpu_custom_call.1} parent=11 // pred_check
        %p190 = pneg %p86
      $region14: #{tpu_custom_call.1} parent=11 // pred_check_branch
        %192 = sbr.rel (%p190) target = $region16
      $region15: #{tpu_custom_call.1} parent=11 // pred_region
        _
      $region16: #{tpu_custom_call.1} parent=11 // pred_fallthru
        _
      // Predicated region
      $region17: #{tpu_custom_call.1} parent=11 // pred_check
        %p193 = pneg %p107
      $region18: #{tpu_custom_call.1} parent=11 // pred_check_branch
        %195 = sbr.rel (%p193) target = $region20
      $region19: #{tpu_custom_call.1} parent=11 // pred_region
        _
      $region20: #{tpu_custom_call.1} parent=11 // pred_fallthru
        _
      // Predicated region
      $region21: #{tpu_custom_call.1} parent=11 // pred_check
        %p196 = pneg %p128
      $region22: #{tpu_custom_call.1} parent=11 // pred_check_branch
        %198 = sbr.rel (%p196) target = $region24
      $region23: #{tpu_custom_call.1} parent=11 // pred_region
        _
      $region24: #{tpu_custom_call.1} parent=11 // pred_fallthru
        _
      // Predicated region
      $region25: #{tpu_custom_call.1} parent=11 // pred_check
        %p199 = pneg %p149
      $region26: #{tpu_custom_call.1} parent=11 // pred_check_branch
        %201 = sbr.rel (%p199) target = $region28
      $region27: #{tpu_custom_call.1} parent=11 // pred_region
        _
      $region28: #{tpu_custom_call.1} parent=11 // pred_fallthru
        _
    $region12: #{tpu_custom_call.1} parent=5 // pred_fallthru
      _
    %p202 = scmp.lt.s32.totalorder %s13, 2
    // Predicated region
    $region29: #{tpu_custom_call.1} parent=5 // pred_check
      %p203 = pneg %p202
    $region30: #{tpu_custom_call.1} parent=5 // pred_check_branch
      %205 = sbr.rel (%p203) target = $region32
    $region31: #{tpu_custom_call.1} parent=5 // pred_region
      // Predicated region
      $region33: #{tpu_custom_call.1} parent=31 // pred_check
        %p206 = pneg %p33
      $region34: #{tpu_custom_call.1} parent=31 // pred_check_branch
        %208 = sbr.rel (%p206) target = $region36
      $region35: #{tpu_custom_call.1} parent=31 // pred_region
        %p209 = scmp.lt.s32.totalorder %s13, 1
        %s210 = scalar_select %p209, %s13, 1
        %s211 = smul.addr %s210, 4
        %s212 = smul.addr %s211, 4
        %s213 = scalar_lea.vmem %s0, %s212
      $region36: #{tpu_custom_call.1} parent=31 // pred_fallthru
        _
      // Predicated region
      $region37: #{tpu_custom_call.1} parent=31 // pred_check
        %p214 = pneg %p59
      $region38: #{tpu_custom_call.1} parent=31 // pred_check_branch
        %216 = sbr.rel (%p214) target = $region40
      $region39: #{tpu_custom_call.1} parent=31 // pred_region
        %p217 = scmp.lt.s32.totalorder %s13, 1
        %s218 = scalar_select %p217, %s13, 1
        %s219 = smul.addr %s218, 4
        %s220 = smul.addr %s219, 4
        %s221 = scalar_lea.vmem %s1, %s220
      $region40: #{tpu_custom_call.1} parent=31 // pred_fallthru
        _
    $region32: #{tpu_custom_call.1} parent=5 // pred_fallthru
      _
    %p222 = scmp.le.s32.totalorder 1, %s13
    %p223 = scmp.lt.s32.totalorder %s13, 3
    %p224 = pnand %p222, %p223
    %p225 = pneg %p224
    // Predicated region
    $region41: #{tpu_custom_call.1} parent=5 // pred_check
      _
    $region42: #{tpu_custom_call.1} parent=5 // pred_check_branch
      %227 = sbr.rel (%p224) target = $region44
    $region43: #{tpu_custom_call.1} parent=5 // pred_region
      %s228 = ssub.s32 %s13, 1
      %p229 = scmp.lt.s32.totalorder %s18, 1
      %s230 = scalar_select %p229, %s18, 1
      %s231 = smul.addr %s230, 4
      %s232 = smul.addr %s231, 4
      %s233 = scalar_lea.vmem %s0, %s232
      %p234 = pneg %p39
      %p235 = pneg %p36
      %p236 = scmp.lt.s32.totalorder %s18, 1
      %s237 = scalar_select %p236, %s18, 1
      %s238 = smul.addr %s237, 4
      %s239 = smul.addr %s238, 4
      %s240 = scalar_lea.vmem %s1, %s239
      %p241 = pneg %p65
      %p242 = pneg %p62
      %p243 = pneg %p86
      %p244 = pneg %p83
      %p245 = pneg %p107
      %p246 = pneg %p104
      %p247 = pneg %p128
      %p248 = pneg %p125
      %p249 = pneg %p149
      %p250 = pneg %p146
      %p251 = pneg %p175
      %p252 = pneg %p172
      %p253 = scmp.lt.s32.totalorder %s18, 1
      %s254 = scalar_select %p253, %s18, 1
      %s255 = scalar_lea.vmem %s6, %s254
      %p256 = scmp.lt.s32.totalorder %s18, 1
      %s257 = scalar_select %p256, %s18, 1
      %s258 = smul.addr %s257, 4
      %s259 = smul.addr %s258, 4
      %s260 = scalar_lea.vmem %s0, %s259
      %p261 = scmp.lt.s32.totalorder %s18, 1
      %s262 = scalar_select %p261, %s18, 1
      %s263 = smul.addr %s262, 4
      %s264 = smul.addr %s263, 4
      %s265 = scalar_lea.vmem %s1, %s264
      %p266 = scmp.lt.s32.totalorder %s18, 1
      %s267 = scalar_select %p266, %s18, 1
      %s268 = scalar_lea.vmem %s6, %s267
      %v269 = vld [vmem:[%s265] sm:$0xf]
      %v270 = vld [vmem:[%s265 + $0x4] sm:$0xf]
      %v271 = vld [vmem:[%s265 + $0x8] sm:$0xf]
      %v272 = vld [vmem:[%s265 + $0xc] sm:$0xf]
      %v273 = vunpack.c.l.bf16 %v269
      %v274 = vunpack.c.l.bf16 %v270
      %v275 = vunpack.c.l.bf16 %v271
      %v276 = vunpack.c.l.bf16 %v272
      %v277 = vld [vmem:[%s260] sm:$0xf]
      %v278 = vld [vmem:[%s260 + $0x4] sm:$0xf]
      %v279 = vld [vmem:[%s260 + $0x8] sm:$0xf]
      %v280 = vld [vmem:[%s260 + $0xc] sm:$0xf]
      %v281 = vunpack.c.l.bf16 %v277
      %v282 = vunpack.c.l.bf16 %v278
      %v283 = vunpack.c.l.bf16 %v279
      %v284 = vunpack.c.l.bf16 %v280
      %v285 = vld [vmem:[%s2] sm:$0xf]
      %vm286 = vcmask 31744
      %v288 = vsel %vm286, %v273, 0
      %v291 = vsel %vm286, %v274, 0
      %v294 = vsel %vm286, %v275, 0
      %v297 = vsel %vm286, %v276, 0
      %vm299 = vcmask 1043456
      %v301 = vsel %vm299, %v285, 0
      %303 = vmatprep.subr.mxu0 0.0
      %304 = vmatpush1.msra.mxu0 0.0
      %305 = vmatprep.subr.mxu0 0.0
      %306 = vmatpush1.msra.mxu0 0.0
      %307 = vmatprep.subr.mxu0 0.0
      %308 = vmatpush1.msra.mxu0 0.0
      %309 = vmatprep.subr.mxu0 0.0
      %310 = vmatpush1.msra.mxu0 0.0
      %311 = vmatprep.subr.mxu0 0.0
      %312 = vmatpush1.msra.mxu0 0.0
      %313 = vmatprep.subr.mxu0 0.0
      %314 = vmatpush1.msra.mxu0 0.0
      %315 = vmatprep.subr.mxu0 0.0
      %316 = vmatpush1.msra.mxu0 0.0
      %317 = vmatprep.subr.mxu0 0.0
      %318 = vmatpush1.msra.mxu0 0.0
      %319 = vmatprep.subr.mxu0 0.0
      %320 = vmatpush1.msra.mxu0 0.0
      %321 = vmatprep.subr.mxu0 0.0
      %322 = vmatpush1.msra.mxu0 0.0
      %323 = vmatprep.subr.mxu0 0.0
      %324 = vmatpush1.msra.mxu0 0.0
      %325 = vmatprep.subr.mxu0 0.0
      %326 = vmatpush1.msra.mxu0 0.0
      %327 = vmatprep.subr.mxu0 0.0
      %328 = vmatpush1.msra.mxu0 0.0
      %329 = vmatprep.subr.mxu0 0.0
      %330 = vmatpush1.msra.mxu0 0.0
      %331 = vmatprep.subr.mxu0 0.0
      %332 = vmatpush1.msra.mxu0 0.0
      %333 = vmatprep.subr.mxu0 0.0
      %334 = vmatpush1.msra.mxu0 %v301
      %335 = vmatprep.subr.mxu0 0.0
      %336 = vmatpush2.msra.mxu0 0.0
      %337 = vmatprep.subr.mxu0 0.0
      %338 = vmatpush2.msra.mxu0 0.0
      %339 = vmatprep.subr.mxu0 0.0
      %340 = vmatpush2.msra.mxu0 0.0
      %341 = vmatprep.subr.mxu0 0.0
      %342 = vmatpush2.msra.mxu0 0.0
      %343 = vmatprep.subr.mxu0 0.0
      %344 = vmatpush2.msra.mxu0 0.0
      %345 = vmatprep.subr.mxu0 0.0
      %346 = vmatpush2.msra.mxu0 0.0
      %347 = vmatprep.subr.mxu0 0.0
      %348 = vmatpush2.msra.mxu0 0.0
      %349 = vmatprep.subr.mxu0 0.0
      %350 = vmatpush2.msra.mxu0 0.0
      %351 = vmatprep.subr.mxu0 0.0
      %352 = vmatpush2.msra.mxu0 0.0
      %353 = vmatprep.subr.mxu0 0.0
      %354 = vmatpush2.msra.mxu0 0.0
      %355 = vmatprep.subr.mxu0 0.0
      %356 = vmatpush2.msra.mxu0 0.0
      %357 = vmatprep.subr.mxu0 0.0
      %358 = vmatpush2.msra.mxu0 0.0
      %359 = vmatprep.subr.mxu0 0.0
      %360 = vmatpush2.msra.mxu0 0.0
      %361 = vmatprep.subr.mxu0 0.0
      %362 = vmatpush2.msra.mxu0 0.0
      %363 = vmatprep.subr.mxu0 0.0
      %364 = vmatpush2.msra.mxu0 0.0
      %365 = vmatprep.subr.mxu0 0.0
      %366 = vmatpush2.msra.mxu0 0.0
      %367 = vmatprep.mubr.f32.mxu0 0.0
      %368 = vmatmul.mubr.f32.gmra.mxu0 %v288
      %v369 = vpop.f32.mrf.mxu0
      %v370 = vadd.f32 0.0, %v369
      %v371 = vpop.f32.mrf.mxu0
      %372 = vmatprep.mubr.f32.mxu0 0.0
      %373 = vmatmul.mubr.f32.gmra.mxu0 %v291
      %v374 = vpop.f32.mrf.mxu0
      %v375 = vadd.f32 0.0, %v374
      %v376 = vpop.f32.mrf.mxu0
      %377 = vmatprep.mubr.f32.mxu0 0.0
      %378 = vmatmul.mubr.f32.gmra.mxu0 %v294
      %v379 = vpop.f32.mrf.mxu0
      %v380 = vadd.f32 0.0, %v379
      %v381 = vpop.f32.mrf.mxu0
      %382 = vmatprep.mubr.f32.mxu0 0.0
      %383 = vmatmul.mubr.f32.gmra.mxu0 %v297
      %v384 = vpop.f32.mrf.mxu0
      %v385 = vadd.f32 0.0, %v384
      %v386 = vpop.f32.mrf.mxu0
      %387 = vdwg.mxu0
      %v388 = vld [vmem:[%s3] sm:$0x1]
      %v390 = vlaneseq
      %v391 = vshrl.u32 %v390, 7
      %v392 = vsub.s32 0, %v391
      %v393 = vrot.slane %v388, %v392
      %vm395 = vcmask 261120
      %v397 = vsel %vm395, %v281, 0
      %v400 = vsel %vm395, %v282, 0
      %v403 = vsel %vm395, %v283, 0
      %v406 = vsel %vm395, %v284, 0
      %408 = vmatprep.subr.mxu0 0.0
      %409 = vmatpush1.msra.mxu0 0.0
      %410 = vmatprep.subr.mxu0 0.0
      %411 = vmatpush1.msra.mxu0 0.0
      %412 = vmatprep.subr.mxu0 0.0
      %413 = vmatpush1.msra.mxu0 0.0
      %414 = vmatprep.subr.mxu0 0.0
      %415 = vmatpush1.msra.mxu0 0.0
      %416 = vmatprep.subr.mxu0 0.0
      %417 = vmatpush1.msra.mxu0 0.0
      %418 = vmatprep.subr.mxu0 0.0
      %419 = vmatpush1.msra.mxu0 0.0
      %420 = vmatprep.subr.mxu0 0.0
      %421 = vmatpush1.msra.mxu0 0.0
      %422 = vmatprep.subr.mxu0 0.0
      %423 = vmatpush1.msra.mxu0 0.0
      %424 = vmatprep.subr.mxu0 0.0
      %425 = vmatpush1.msra.mxu0 0.0
      %426 = vmatprep.subr.mxu0 0.0
      %427 = vmatpush1.msra.mxu0 0.0
      %428 = vmatprep.subr.mxu0 0.0
      %429 = vmatpush1.msra.mxu0 0.0
      %430 = vmatprep.subr.mxu0 0.0
      %431 = vmatpush1.msra.mxu0 0.0
      %432 = vmatprep.subr.mxu0 0.0
      %433 = vmatpush1.msra.mxu0 %v385
      %434 = vmatprep.subr.mxu0 0.0
      %435 = vmatpush1.msra.mxu0 %v380
      %436 = vmatprep.subr.mxu0 0.0
      %437 = vmatpush1.msra.mxu0 %v375
      %438 = vmatprep.subr.mxu0 0.0
      %439 = vmatpush1.msra.mxu0 %v370
      %440 = vmatprep.subr.mxu0 0.0
      %441 = vmatpush2.msra.mxu0 0.0
      %442 = vmatprep.subr.mxu0 0.0
      %443 = vmatpush2.msra.mxu0 0.0
      %444 = vmatprep.subr.mxu0 0.0
      %445 = vmatpush2.msra.mxu0 0.0
      %446 = vmatprep.subr.mxu0 0.0
      %447 = vmatpush2.msra.mxu0 0.0
      %448 = vmatprep.subr.mxu0 0.0
      %449 = vmatpush2.msra.mxu0 0.0
      %450 = vmatprep.subr.mxu0 0.0
      %451 = vmatpush2.msra.mxu0 0.0
      %452 = vmatprep.subr.mxu0 0.0
      %453 = vmatpush2.msra.mxu0 0.0
      %454 = vmatprep.subr.mxu0 0.0
      %455 = vmatpush2.msra.mxu0 0.0
      %456 = vmatprep.subr.mxu0 0.0
      %457 = vmatpush2.msra.mxu0 0.0
      %458 = vmatprep.subr.mxu0 0.0
      %459 = vmatpush2.msra.mxu0 0.0
      %460 = vmatprep.subr.mxu0 0.0
      %461 = vmatpush2.msra.mxu0 0.0
      %462 = vmatprep.subr.mxu0 0.0
      %463 = vmatpush2.msra.mxu0 0.0
      %464 = vmatprep.subr.mxu0 0.0
      %465 = vmatpush2.msra.mxu0 0.0
      %466 = vmatprep.subr.mxu0 0.0
      %467 = vmatpush2.msra.mxu0 0.0
      %468 = vmatprep.subr.mxu0 0.0
      %469 = vmatpush2.msra.mxu0 0.0
      %470 = vmatprep.subr.mxu0 0.0
      %471 = vmatpush2.msra.mxu0 0.0
      %472 = vmatprep.mubr.f32.mxu0 0.0
      %473 = vmatmul.mubr.f32.gmra.mxu0 %v397
      %v474 = vpop.f32.mrf.mxu0
      %v475 = vadd.f32 %v393, %v474
      %v476 = vpop.f32.mrf.mxu0
      %477 = vmatprep.mubr.f32.mxu0 0.0
      %478 = vmatmul.mubr.f32.gmra.mxu0 %v400
      %v479 = vpop.f32.mrf.mxu0
      %v480 = vadd.f32 %v393, %v479
      %v481 = vpop.f32.mrf.mxu0
      %482 = vmatprep.mubr.f32.mxu0 0.0
      %483 = vmatmul.mubr.f32.gmra.mxu0 %v403
      %v484 = vpop.f32.mrf.mxu0
      %v485 = vadd.f32 %v393, %v484
      %v486 = vpop.f32.mrf.mxu0
      %487 = vmatprep.mubr.f32.mxu0 0.0
      %488 = vmatmul.mubr.f32.gmra.mxu0 %v406
      %v489 = vpop.f32.mrf.mxu0
      %v490 = vadd.f32 %v393, %v489
      %v491 = vpop.f32.mrf.mxu0
      %492 = vdwg.mxu0
      %v493 = vmax.f32 %v475, 0.0
      %v494 = vmax.f32 %v480, 0.0
      %v495 = vmax.f32 %v485, 0.0
      %v496 = vmax.f32 %v490, 0.0
      %v497 = vld [vmem:[%s4] sm:$0xff]
      %v498 = vld [vmem:[%s4 + $0x8] sm:$0xff]
      %v499 = vld [vmem:[%s4 + $0x10] sm:$0xff]
      %v500 = vld [vmem:[%s4 + $0x18] sm:$0xff]
      %v501 = vmul.f32 %v493, %v497
      %v502 = vmul.f32 %v494, %v498
      %v503 = vmul.f32 %v495, %v499
      %v504 = vmul.f32 %v496, %v500
      %vm505 = vcmask 15360
      %v506 = vsel %vm505, %v501, 0.0
      %v507 = vsel %vm505, %v502, 0.0
      %v508 = vadd.f32 %v506, %v507
      %v509 = vsel %vm505, %v503, 0.0
      %v510 = vadd.f32 %v508, %v509
      %v511 = vsel %vm505, %v504, 0.0
      %v512 = vadd.f32 %v510, %v511
      %513 = vadd.xlane.f32.xlu0 %v512
      %v514 = vpop.xlane.xlu0 %513
      %v515 = vrot.slane %v514, 4
      %v516 = vadd.f32 %v514, %v515
      %v517 = vrot.slane %v516, 2
      %v518 = vadd.f32 %v516, %v517
      %v519 = vrot.slane %v518, 1
      %v520 = vadd.f32 %v518, %v519
      %s521 = sld [smem:[#allocation2]]
      %v522 = vstv %s521
      %v523 = vadd.f32 %v520, %v522
      %v524 = vxor.u32 %v523, 2147483648
      %v525 = vmul.f32 %v524, 1.442695
      %v526 = vpow.pop %v525
      %v527 = vadd.f32 %v526, 1.0
      %v528 = vrcp.pop %v527
      %v529 = vmul.f32 1.0, %v528
      %vm530 = vcmask 0
      %531 = vst.msk [vmem:[%s268] sm:$0x1] %vm530, %v529
      %p532 = scmp.lt.s32.totalorder %s18, 1
      %s533 = scalar_select %p532, %s18, 1
      %s534 = scalar_lea.vmem %s6, %s533
      // Predicated region
      $region45: #{tpu_custom_call.1} parent=43 // pred_check
        %p535 = pneg %p172
      $region46: #{tpu_custom_call.1} parent=43 // pred_check_branch
        %537 = sbr.rel (%p535) target = $region48
      $region47: #{tpu_custom_call.1} parent=43 // pred_region
        _
      $region48: #{tpu_custom_call.1} parent=43 // pred_fallthru
        _
    $region44: #{tpu_custom_call.1} parent=5 // pred_fallthru
      _
    %p538 = scmp.le.s32.totalorder 2, %s13
    // Predicated region
    $region49: #{tpu_custom_call.1} parent=5 // pred_check
      %p539 = pneg %p538
    $region50: #{tpu_custom_call.1} parent=5 // pred_check_branch
      %541 = sbr.rel (%p539) target = $region52
    $region51: #{tpu_custom_call.1} parent=5 // pred_region
      %s542 = ssub.s32 %s13, 2
      // Predicated region
      $region53: #{tpu_custom_call.1} parent=51 // pred_check
        %p543 = pneg %p178
      $region54: #{tpu_custom_call.1} parent=51 // pred_check_branch
        %545 = sbr.rel (%p543) target = $region56
      $region55: #{tpu_custom_call.1} parent=51 // pred_region
        %p546 = scmp.lt.s32.totalorder %s19, 1
        %s547 = scalar_select %p546, %s19, 1
        %s548 = scalar_lea.vmem %s6, %s547
      $region56: #{tpu_custom_call.1} parent=51 // pred_fallthru
        _
    $region52: #{tpu_custom_call.1} parent=5 // pred_fallthru
      _
  $region6: #{tpu_custom_call.1} parent=0 // loop_footer
    %s17 = sadd.s32 1, %s13
  $region7: #{tpu_custom_call.1} parent=0 // loop_footer_branch
    %12 = sbr.rel target = $region3
  $region8: #{tpu_custom_call.1} parent=0 // loop_exit
    _

</llo_original>
